<compile_context>
chip_gen: v7x
topology: tpu7x:2x2x1
jax: 0.10.0
libtpu: 0.0.40
codegen_flags: <defaults>
</compile_context>

<pallas_src>
import functools

import numpy as np
import jax
import jax.numpy as jnp
from jax.experimental import pallas as pl
from jax.experimental.pallas import tpu as pltpu

# Synthetic, deterministic stand-in for `search_limbs(convention)['body']`:
# SMPL-style 24-joint kinematic tree (L = 23 limbs, already sorted & deduped).
_SMPL_BODY_LIMBS = np.array([
    [0, 1], [0, 2], [0, 3], [1, 4], [2, 5], [3, 6], [4, 7], [5, 8],
    [6, 9], [7, 10], [8, 11], [9, 12], [9, 13], [9, 14], [12, 15],
    [13, 16], [14, 17], [16, 18], [17, 19], [18, 20], [19, 21],
    [20, 22], [21, 23],
], dtype=np.int32)  # (L, 2)  columns: (src, dst)


def _limb_length_loss_kernel(lhs_ref, rhs_ref, out_ref, *,
                             n_batch, n_limbs, conf_threshold, loss_weight):
    """lhs_ref: (8N, K) stacked coords+confs; rhs_ref: (K, 3L) selectors."""
    n = n_batch
    L = n_limbs

    # --- single fused MXU push: (8N, K) @ (K, 3L) -> (8N, 3L) ---------------
    prod = jnp.dot(lhs_ref[...], rhs_ref[...],
                   preferred_element_type=jnp.float32)

    # --- limb lengths: coord rows x dmat columns ----------------------------
    vec = prod[:6 * n, :L]                       # (6N, L) limb vectors (x,y,z blocks)
    sq = vec * vec
    lensq = sq[:2 * n] + sq[2 * n:4 * n] + sq[4 * n:6 * n]   # (2N, L)
    lengths = jnp.sqrt(lensq)
    len_p = lengths[:n]                          # (N, L)
    len_t = lengths[n:]                          # (N, L)

    # --- limb confidences: conf rows x one-hot src/dst columns --------------
    # One-hot gather is exact selection, so thresholding after the dot is
    # identical to thresholding the keypoint confidences first.
    c_src = prod[6 * n:, L:2 * L]                # (2N, L)
    c_dst = prod[6 * n:, 2 * L:3 * L]            # (2N, L)
    c_src = jnp.where(c_src > conf_threshold, c_src, 0.0)
    c_dst = jnp.where(c_dst > conf_threshold, c_dst, 0.0)
    limb_conf = jnp.minimum(c_src, c_dst)        # (2N, L)  rows: [pred; target]
    lc = limb_conf[:n] * limb_conf[n:]           # (N, L)

    # --- squared length difference, reduction='mean' ------------------------
    diff = len_t - len_p
    total = jnp.sum(diff * diff * lc)
    out_ref[0, 0] = (total / jnp.float32(n * L)) * loss_weight


def limb_length_loss(pred, target, pred_conf=None, target_conf=None, *,
                     limb_idxs=_SMPL_BODY_LIMBS, conf_threshold=1.0,
                     loss_weight=1.0):
    """pred/target: (N, K, 3); pred_conf/target_conf: (N, K, 1) or None."""
    N, K, D = pred.shape
    assert D == 3 and target.shape == pred.shape
    limb_idxs = np.asarray(limb_idxs)
    L = limb_idxs.shape[0]

    if pred_conf is None:
        pred_conf = jnp.ones((N, K), jnp.float32)
    else:
        pred_conf = jnp.reshape(pred_conf, (N, K)).astype(jnp.float32)
    if target_conf is None:
        target_conf = jnp.ones((N, K), jnp.float32)
    else:
        target_conf = jnp.reshape(target_conf, (N, K)).astype(jnp.float32)

    # ---- single stacked LHS: (8N, K) ---------------------------------------
    # rows [0:6N)  : x,y,z coordinate blocks of [pred; target]
    # rows [6N:8N) : keypoint confidences of   [pred; target]
    coords = jnp.concatenate([pred, target], axis=0).astype(jnp.float32)  # (2N, K, 3)
    coords = jnp.transpose(coords, (2, 0, 1)).reshape(6 * N, K)           # (6N, K)
    confs = jnp.concatenate([pred_conf, target_conf], axis=0)             # (2N, K)
    lhs = jnp.concatenate([coords, confs], axis=0)                        # (8N, K)

    # ---- single static selector RHS: (K, 3L) = [dmat | onehot_src | onehot_dst]
    eye = np.eye(K, dtype=np.float32)
    ssrc = eye[:, limb_idxs[:, 0]]               # (K, L)
    sdst = eye[:, limb_idxs[:, 1]]               # (K, L)
    rhs = jnp.asarray(np.concatenate([sdst - ssrc, ssrc, sdst], axis=1))  # (K, 3L)

    kernel = functools.partial(
        _limb_length_loss_kernel,
        n_batch=N, n_limbs=L,
        conf_threshold=float(conf_threshold),
        loss_weight=float(loss_weight))

    out = pl.pallas_call(
        kernel,
        out_shape=jax.ShapeDtypeStruct((1, 1), jnp.float32),
        in_specs=[pl.BlockSpec(memory_space=pltpu.MemorySpace.VMEM),
                  pl.BlockSpec(memory_space=pltpu.MemorySpace.VMEM)],
        out_specs=pl.BlockSpec(memory_space=pltpu.MemorySpace.SMEM),
    )(lhs, rhs)
    return out[0, 0]


def _reference_loss(pred, target, pred_conf, target_conf, limb_idxs,
                    conf_threshold, loss_weight):
    """Pure-JAX reference mirroring the (intended) PyTorch semantics."""
    def limb_len(kp):
        src = kp[:, limb_idxs[:, 0], :]
        dst = kp[:, limb_idxs[:, 1], :]
        return jnp.linalg.norm(dst - src, axis=2)

    def limb_conf(c):
        c = jnp.where(c > conf_threshold, c, 0.0)
        return jnp.minimum(c[:, limb_idxs[:, 1]], c[:, limb_idxs[:, 0]])

    ll_t = limb_len(target)
    ll_p = limb_len(pred)
    lc = limb_conf(target_conf) * limb_conf(pred_conf)
    return jnp.mean((ll_t - ll_p) ** 2 * lc) * loss_weight


if __name__ == "__main__":
    key = jax.random.PRNGKey(0)
    k1, k2, k3, k4 = jax.random.split(key, 4)
    N, K = 2, 24

    pred = jax.random.normal(k1, (N, K, 3), jnp.float32)
    target = jax.random.normal(k2, (N, K, 3), jnp.float32)
    # Confidences in (0, 2) so some exceed conf_threshold=1.0 (non-trivial loss).
    pred_conf = jax.random.uniform(k3, (N, K, 1), jnp.float32, 0.0, 2.0)
    target_conf = jax.random.uniform(k4, (N, K, 1), jnp.float32, 0.0, 2.0)

    loss = limb_length_loss(pred, target, pred_conf, target_conf)
    loss = jax.block_until_ready(loss)

    ref = _reference_loss(pred, target,
                          pred_conf.reshape(N, K), target_conf.reshape(N, K),
                          _SMPL_BODY_LIMBS, 1.0, 1.0)
    assert jnp.allclose(loss, ref, rtol=1e-4, atol=1e-6), (float(loss), float(ref))
    print("KERNEL_OK")
</pallas_src>

<mosaic_0001>
module attributes {stable_mosaic.version = 11 : i64} {
  func.func @_limb_length_loss_kernel(%arg0: memref<16x24xf32, #tpu.memory_space<vmem>>, %arg1: memref<24x69xf32, #tpu.memory_space<vmem>>, %arg2: memref<1x1xf32, #tpu.memory_space<smem>>) attributes {dimension_semantics = [], scalar_prefetch = 0 : i64, scratch_operands = 0 : i64, tpu.core_type = #tpu.core_type<tc>} {
    %c0 = arith.constant 0 : index
    %c0_0 = arith.constant 0 : index
    %0 = vector.load %arg0[%c0, %c0_0] : memref<16x24xf32, #tpu.memory_space<vmem>>, vector<16x24xf32>
    %c0_1 = arith.constant 0 : index
    %c0_2 = arith.constant 0 : index
    %1 = vector.load %arg1[%c0_1, %c0_2] : memref<24x69xf32, #tpu.memory_space<vmem>>, vector<24x69xf32>
    %cst = arith.constant dense<0.000000e+00> : vector<16x69xf32>
    %2 = tpu.matmul %0, %1, %cst {dimension_numbers = #tpu.dot_dimension_numbers<[1], [0], [0], [1], [0, 0, 1, 1], [], []>} : vector<16x24xf32>, vector<24x69xf32>, vector<16x69xf32> -> vector<16x69xf32>
    %3 = vector.extract_strided_slice %2 {offsets = [0, 0], sizes = [12, 23], strides = [1, 1]} : vector<16x69xf32> to vector<12x23xf32>
    %4 = arith.mulf %3, %3 : vector<12x23xf32>
    %5 = vector.extract_strided_slice %4 {offsets = [0, 0], sizes = [4, 23], strides = [1, 1]} : vector<12x23xf32> to vector<4x23xf32>
    %6 = vector.extract_strided_slice %4 {offsets = [4, 0], sizes = [4, 23], strides = [1, 1]} : vector<12x23xf32> to vector<4x23xf32>
    %7 = arith.addf %5, %6 : vector<4x23xf32>
    %8 = vector.extract_strided_slice %4 {offsets = [8, 0], sizes = [4, 23], strides = [1, 1]} : vector<12x23xf32> to vector<4x23xf32>
    %9 = arith.addf %7, %8 : vector<4x23xf32>
    %10 = math.sqrt %9 : vector<4x23xf32>
    %11 = vector.extract_strided_slice %10 {offsets = [0, 0], sizes = [2, 23], strides = [1, 1]} : vector<4x23xf32> to vector<2x23xf32>
    %12 = vector.extract_strided_slice %10 {offsets = [2, 0], sizes = [2, 23], strides = [1, 1]} : vector<4x23xf32> to vector<2x23xf32>
    %13 = vector.extract_strided_slice %2 {offsets = [12, 23], sizes = [4, 23], strides = [1, 1]} : vector<16x69xf32> to vector<4x23xf32>
    %14 = vector.extract_strided_slice %2 {offsets = [12, 46], sizes = [4, 23], strides = [1, 1]} : vector<16x69xf32> to vector<4x23xf32>
    %cst_3 = arith.constant 1.000000e+00 : f32
    %15 = vector.broadcast %cst_3 : f32 to vector<4x23xf32>
    %16 = arith.cmpf ogt, %13, %15 : vector<4x23xf32>
    %cst_4 = arith.constant 0.000000e+00 : f32
    %17 = vector.broadcast %cst_4 : f32 to vector<4x23xf32>
    %18 = arith.select %16, %13, %17 : vector<4x23xi1>, vector<4x23xf32>
    %cst_5 = arith.constant 1.000000e+00 : f32
    %19 = vector.broadcast %cst_5 : f32 to vector<4x23xf32>
    %20 = arith.cmpf ogt, %14, %19 : vector<4x23xf32>
    %cst_6 = arith.constant 0.000000e+00 : f32
    %21 = vector.broadcast %cst_6 : f32 to vector<4x23xf32>
    %22 = arith.select %20, %14, %21 : vector<4x23xi1>, vector<4x23xf32>
    %23 = arith.minimumf %18, %22 : vector<4x23xf32>
    %24 = vector.extract_strided_slice %23 {offsets = [0, 0], sizes = [2, 23], strides = [1, 1]} : vector<4x23xf32> to vector<2x23xf32>
    %25 = vector.extract_strided_slice %23 {offsets = [2, 0], sizes = [2, 23], strides = [1, 1]} : vector<4x23xf32> to vector<2x23xf32>
    %26 = arith.mulf %24, %25 : vector<2x23xf32>
    %27 = arith.subf %12, %11 : vector<2x23xf32>
    %28 = arith.mulf %27, %27 : vector<2x23xf32>
    %29 = arith.mulf %28, %26 : vector<2x23xf32>
    %30 = vector.shape_cast %29 : vector<2x23xf32> to vector<1x2x23xf32>
    %cst_7 = arith.constant dense<0.000000e+00> : vector<1xf32>
    %31 = vector.multi_reduction <add>, %30, %cst_7 [1, 2] : vector<1x2x23xf32> to vector<1xf32>
    %32 = vector.shape_cast %31 : vector<1xf32> to vector<1x1x1xf32>
    %33 = vector.extract %32[0, 0, 0] : f32 from vector<1x1x1xf32>
    %cst_8 = arith.constant 4.600000e+01 : f32
    %34 = arith.divf %33, %cst_8 : f32
    %cst_9 = arith.constant 1.000000e+00 : f32
    %35 = arith.mulf %34, %cst_9 : f32
    %c0_10 = arith.constant 0 : index
    %c0_11 = arith.constant 0 : index
    %36 = memref.load %arg2[%c0_10, %c0_11] : memref<1x1xf32, #tpu.memory_space<smem>>
    memref.store %35, %arg2[%c0_10, %c0_11] : memref<1x1xf32, #tpu.memory_space<smem>>
    return
  }
}

</mosaic_0001>

<llo_original>
// kernel: tpu_custom_call.1
$region0: #{tpu_custom_call.1}
  #allocation0 [shape = 'u32[]', space=smem, size = 0x4, offset = 0x4, fixed_abs, tag = 'smem constant byte address 0x4 - core index']
  #allocation1 [shape = 'u32[144,128]{1,0:T(1,128)}', space=vmem, size = 0x12000, scoped, tag = 'internal scratch']
  %s0 = inlined_call_operand.hbm [shape: f32[16,24], index: 0, kind: input, shape index: {}]
  %s1 = inlined_call_operand.hbm [shape: f32[24,69], index: 1, kind: input, shape index: {}]
  %s2 = inlined_call_operand.hbm [shape: f32[1,1], index: 2, kind: output, shape index: {}]
  %s3 = sld [smem:[#allocation0]]
  $region26: #{tpu_custom_call.1} parent=0
    _
  %s5 = ssub.s32 1, %s3
  %s6 = scalar_select 0, %s5, %s3
  $region1: #{tpu_custom_call.1} parent=0
    #allocation2 [shape = 'u8[8192]{0}', space=vmem, size = 0x2000, scoped, tag = 'input window, operand 0, single buffered']
    #allocation3 [shape = 's32[1]{0}', space=sflag, size = 0x4, scoped, tag = 'scoped memory for tpu_custom_call.1']
    #allocation4 [shape = 's32[1]{0}', space=sflag, size = 0x4, scoped, tag = 'scoped memory for tpu_custom_call.1']
    #allocation5 [shape = 'u8[12288]{0}', space=vmem, size = 0x3000, scoped, tag = 'input window, operand 1, single buffered']
    #allocation6 [shape = 's32[1]{0}', space=sflag, size = 0x4, scoped, tag = 'scoped memory for tpu_custom_call.1']
    #allocation7 [shape = 'u8[512]{0}', space=smem, size = 0x200, scoped, tag = 'output window, operand 0, single buffered']
    %7 = vsyncpa [#allocation3], 0
    %8 = vsyncpa [#allocation6], 0
    %9 = vsyncpa [#allocation4], 0
    // Predicated region
    $region2: #{tpu_custom_call.1} parent=1 // pred_check
      _
    $region3: #{tpu_custom_call.1} parent=1 // pred_check_branch
      %11 = sbr.rel (0) target = $region5
    $region4: #{tpu_custom_call.1} parent=1 // pred_region
      %s13 = ssub.s32 256, 256
      %14 = vsyncadd [#allocation3], %s13
      %s15 = sshll.u32 [#allocation2], 4
      %s16 = int_to_ptr.vmem [resolvable:$true] %s15
      %21 = dma.hbm_to_vmem [thread:$0]  %s0, 256, %s16, [#allocation3], 128, 128, 8
    $region5: #{tpu_custom_call.1} parent=1 // pred_fallthru
      _
    // Predicated region
    $region6: #{tpu_custom_call.1} parent=1 // pred_check
      _
    $region7: #{tpu_custom_call.1} parent=1 // pred_check_branch
      %23 = sbr.rel (0) target = $region9
    $region8: #{tpu_custom_call.1} parent=1 // pred_region
      %s25 = ssub.s32 384, 384
      %26 = vsyncadd [#allocation6], %s25
      %s27 = sshll.u32 [#allocation5], 4
      %s28 = int_to_ptr.vmem [resolvable:$true] %s27
      %33 = dma.hbm_to_vmem [thread:$0]  %s1, 384, %s28, [#allocation6], 128, 128, 8
    $region9: #{tpu_custom_call.1} parent=1 // pred_fallthru
      _
    // Predicated region
    $region10: #{tpu_custom_call.1} parent=1 // pred_check
      _
    $region11: #{tpu_custom_call.1} parent=1 // pred_check_branch
      %35 = sbr.rel (0) target = $region13
    $region12: #{tpu_custom_call.1} parent=1 // pred_region
      %36 = dma.done [#allocation3], 256
    $region13: #{tpu_custom_call.1} parent=1 // pred_fallthru
      _
    // Predicated region
    $region14: #{tpu_custom_call.1} parent=1 // pred_check
      _
    $region15: #{tpu_custom_call.1} parent=1 // pred_check_branch
      %38 = sbr.rel (0) target = $region17
    $region16: #{tpu_custom_call.1} parent=1 // pred_region
      %39 = dma.done [#allocation6], 384
    $region17: #{tpu_custom_call.1} parent=1 // pred_fallthru
      _
    %v40 = vld [vmem:[#allocation2] sm:$0xff]
    %v41 = vld [vmem:[#allocation2 + $0x8] sm:$0xff]
    %v42 = vld [vmem:[#allocation5] sm:$0xff]
    %v43 = vld [vmem:[#allocation5 + $0x8] sm:$0xff]
    %v44 = vld [vmem:[#allocation5 + $0x10] sm:$0xff]
    %vm45 = vcmask 195584
    %v47 = vsel %vm45, %v40, 0
    %v50 = vsel %vm45, %v41, 0
    %52 = vmatprep.subr.mxu0 0.0
    %53 = vmatpush1.msra.mxu0 %v42
    %54 = vmatprep.subr.mxu0 0.0
    %55 = vmatpush1.msra.mxu0 %v43
    %56 = vmatprep.subr.mxu0 0.0
    %57 = vmatpush1.msra.mxu0 %v44
    %58 = vmatprep.subr.mxu0 0.0
    %59 = vmatpush1.msra.mxu0 0.0
    %60 = vmatprep.subr.mxu0 0.0
    %61 = vmatpush1.msra.mxu0 0.0
    %62 = vmatprep.subr.mxu0 0.0
    %63 = vmatpush1.msra.mxu0 0.0
    %64 = vmatprep.subr.mxu0 0.0
    %65 = vmatpush1.msra.mxu0 0.0
    %66 = vmatprep.subr.mxu0 0.0
    %67 = vmatpush1.msra.mxu0 0.0
    %68 = vmatprep.subr.mxu0 0.0
    %69 = vmatpush1.msra.mxu0 0.0
    %70 = vmatprep.subr.mxu0 0.0
    %71 = vmatpush1.msra.mxu0 0.0
    %72 = vmatprep.subr.mxu0 0.0
    %73 = vmatpush1.msra.mxu0 0.0
    %74 = vmatprep.subr.mxu0 0.0
    %75 = vmatpush1.msra.mxu0 0.0
    %76 = vmatprep.subr.mxu0 0.0
    %77 = vmatpush1.msra.mxu0 0.0
    %78 = vmatprep.subr.mxu0 0.0
    %79 = vmatpush1.msra.mxu0 0.0
    %80 = vmatprep.subr.mxu0 0.0
    %81 = vmatpush1.msra.mxu0 0.0
    %82 = vmatprep.subr.mxu0 0.0
    %83 = vmatpush1.msra.mxu0 0.0
    %84 = vmatprep.subr.mxu0 0.0
    %85 = vmatpush1.msra.mxu0 0.0
    %86 = vmatprep.subr.mxu0 0.0
    %87 = vmatpush1.msra.mxu0 0.0
    %88 = vmatprep.subr.mxu0 0.0
    %89 = vmatpush1.msra.mxu0 0.0
    %90 = vmatprep.subr.mxu0 0.0
    %91 = vmatpush1.msra.mxu0 0.0
    %92 = vmatprep.subr.mxu0 0.0
    %93 = vmatpush1.msra.mxu0 0.0
    %94 = vmatprep.subr.mxu0 0.0
    %95 = vmatpush1.msra.mxu0 0.0
    %96 = vmatprep.subr.mxu0 0.0
    %97 = vmatpush1.msra.mxu0 0.0
    %98 = vmatprep.subr.mxu0 0.0
    %99 = vmatpush1.msra.mxu0 0.0
    %100 = vmatprep.subr.mxu0 0.0
    %101 = vmatpush1.msra.mxu0 0.0
    %102 = vmatprep.subr.mxu0 0.0
    %103 = vmatpush1.msra.mxu0 0.0
    %104 = vmatprep.subr.mxu0 0.0
    %105 = vmatpush1.msra.mxu0 0.0
    %106 = vmatprep.subr.mxu0 0.0
    %107 = vmatpush1.msra.mxu0 0.0
    %108 = vmatprep.subr.mxu0 0.0
    %109 = vmatpush1.msra.mxu0 0.0
    %110 = vmatprep.subr.mxu0 0.0
    %111 = vmatpush1.msra.mxu0 0.0
    %112 = vmatprep.subr.mxu0 0.0
    %113 = vmatpush1.msra.mxu0 0.0
    %114 = vmatprep.subr.mxu0 0.0
    %115 = vmatpush1.msra.mxu0 0.0
    %116 = vmatprep.mubr.f32.mxu0 0.0
    %117 = vmatmul.mubr.f32.gmra.mrb[0].mxu0 %v47
    %v118 = vpop.f32.mrb[0].mxu0
    %v119 = vadd.f32 0.0, %v118
    %v120 = vpop.f32.mrb[0].mxu0
    %121 = vmatprep.mubr.f32.mxu0 0.0
    %122 = vmatmul.mubr.f32.gmra.mrb[0].mxu0 %v50
    %v123 = vpop.f32.mrb[0].mxu0
    %v124 = vadd.f32 0.0, %v123
    %v125 = vpop.f32.mrb[0].mxu0
    %126 = vdwg.mxu0
    %v127 = vmul.f32 %v119, %v119
    %v128 = vmul.f32 %v124, %v124
    %v130 = vrot.slane %v127, 4
    %v132 = vadd.f32 %v127, %v130
    %v133 = vadd.f32 %v132, %v128
    %v134 = vrsqrt.pop %v133
    %v135 = vmul.f32 %v133, %v134
    %vm136 = vcmp.eq.f32.partialorder %v133, inf
    %v137 = vsel %vm136, %v133, %v135
    %vm138 = vcmp.eq.f32.partialorder %v133, 0.0
    %v139 = vand.u32 %v133, 2147483648
    %v140 = vsel %vm138, %v139, %v137
    %vm141 = vcmp.gt.f32.partialorder %v124, 1.0
    %v142 = vsel %vm141, %v124, 0.0
    %144 = vrot.lane.b32.xlu0 %v142, 105
    %v145 = vpop.permute.xlu0 %144
    %v147 = vmin.f32 %v142, %v145
    %v149 = vrot.slane %v147, 2
    %v151 = vmul.f32 %v147, %v149
    %v153 = vrot.slane %v140, 6
    %v155 = vsub.f32 %v140, %v153
    %v156 = vmul.f32 %v155, %v155
    %v158 = vrot.slane %v151, 2
    %159 = vrot.lane.b32.xlu0 %v158, 105
    %v160 = vpop.permute.xlu0 %159
    %v162 = vmul.f32 %v156, %v160
    %v164 = vrot.slane %v162, 2
    %vm166 = vcmask 181248
    %v167 = vsel %vm166, %v164, 0.0
    %168 = vadd.xlane.f32.xlu0 %v167
    %v169 = vpop.xlane.xlu0 %168
    %v170 = vrot.slane %v169, 4
    %v171 = vadd.f32 %v169, %v170
    %v172 = vrot.slane %v171, 2
    %v173 = vadd.f32 %v171, %v172
    %v174 = vrot.slane %v173, 1
    %v175 = vadd.f32 %v173, %v174
    %s176 = vtos %v175
    %v177 = vrcp.pop 46.0
    %s178 = vtos %v177
    %s179 = smul.f32 %s176, %s178
    %s180 = scalar_lea.smem [#allocation7], 0
    %181 = sst [smem:[%s180]] %s179
    // Predicated region
    $region18: #{tpu_custom_call.1} parent=1 // pred_check
      _
    $region19: #{tpu_custom_call.1} parent=1 // pred_check_branch
      %183 = sbr.rel (0) target = $region21
    $region20: #{tpu_custom_call.1} parent=1 // pred_region
      %s185 = ssub.s32 16, 16
      %186 = vsyncadd [#allocation4], %s185
      %189 = dma.smem_to_hbm [#allocation7], 16, %s2, [#allocation4]
    $region21: #{tpu_custom_call.1} parent=1 // pred_fallthru
      _
    // Predicated region
    $region22: #{tpu_custom_call.1} parent=1 // pred_check
      _
    $region23: #{tpu_custom_call.1} parent=1 // pred_check_branch
      %191 = sbr.rel (0) target = $region25
    $region24: #{tpu_custom_call.1} parent=1 // pred_region
      %192 = dma.done [#allocation4], 16
    $region25: #{tpu_custom_call.1} parent=1 // pred_fallthru
      _
    %193 = sfence
    %194 = vsyncpa [#allocation3], 1
    %195 = vsyncpa [#allocation6], 1
    %196 = vsyncpa [#allocation4], 1

</llo_original>
